<compile_context>
chip_gen: v7x
topology: tpu7x:2x2x1
jax: 0.10.0
libtpu: 0.0.40
codegen_flags: <defaults>
</compile_context>

<pallas_src>
import jax
import jax.numpy as jnp
from jax import lax
from jax.experimental import pallas as pl
from jax.experimental.pallas import tpu as pltpu

BN_EPS = 1e-5
LANE = 128
SUBLANE = 8
NCORES = 2  # leading "parallel" grid axis in pass 1 (megacore split on v7x)


def _round_up(x, m):
    return (x + m - 1) // m * m


def _cdiv(a, b):
    return -(-a // b)


def _device_vmem_bytes():
    try:
        return int(pltpu.get_tpu_info().vmem_capacity_bytes)
    except Exception:
        return 64 * 1024 * 1024  # conservative (v7x-sized) fallback


def _vmem_limit_bytes(estimate, cap):
    # 2x headroom over an estimate that counts grid-invariant blocks once,
    # floor 16 MiB, capped safely below the device's physical VMEM.
    return int(min(max(2 * estimate, 16 * 1024 * 1024), cap))


# ---------- Pass 1: Linear-1 (bf16 MXU, f32 acc) + per-core batch stats ----------
def _linear1_stats_kernel(x_ref, w1_ref, h_ref, sum_ref, sumsq_ref):
    @pl.when(pl.program_id(1) == 0)
    def _():
        sum_ref[...] = jnp.zeros_like(sum_ref)
        sumsq_ref[...] = jnp.zeros_like(sumsq_ref)

    h = jnp.dot(x_ref[...], w1_ref[...], preferred_element_type=jnp.float32)
    # Store intermediate in bf16 (halves the h HBM round-trip); the batch
    # statistics below are taken from the f32 accumulator before the cast.
    h_ref[...] = h.astype(h_ref.dtype)
    # (1, Hp) column sums broadcast over the 8-sublane accumulator block:
    # every sublane row holds the same running total (row 0 read back outside).
    sum_ref[...] += jnp.sum(h, axis=0, keepdims=True)
    sumsq_ref[...] += jnp.sum(h * h, axis=0, keepdims=True)


# ---------- Pass 2: folded BN (one FMA) + ReLU + Linear-2 (bf16 MXU) ----------
def _bn_relu_linear2_kernel(h_ref, scale_ref, shift_ref, w2_ref, b2_ref, o_ref):
    h = h_ref[...].astype(jnp.float32)                         # bf16 -> f32 VPU math
    a = jnp.maximum(h * scale_ref[...] + shift_ref[...], 0.0)  # BN folded into one FMA
    out = jnp.dot(a.astype(jnp.bfloat16), w2_ref[...],
                  preferred_element_type=jnp.float32) + b2_ref[...]
    o_ref[...] = out.astype(o_ref.dtype)


def prepare_params(w1, b1, gamma, beta, w2, b2):
    """Pad + cast the weights once (hoisted out of the per-call path)."""
    # b1 is intentionally dropped: a bias immediately followed by
    # training-mode BatchNorm is cancelled exactly by the mean subtraction.
    del b1
    D, H = w1.shape
    P = w2.shape[1]
    Dp, Hp, Pp = _round_up(D, LANE), _round_up(H, LANE), _round_up(P, LANE)
    f32, bf16 = jnp.float32, jnp.bfloat16
    w1p = jnp.zeros((Dp, Hp), bf16).at[:D, :H].set(w1.astype(bf16))
    w2p = jnp.zeros((Hp, Pp), bf16).at[:H, :P].set(w2.astype(bf16))
    b2p = jnp.zeros((1, Pp), f32).at[:, :P].set(b2.reshape(1, P).astype(f32))
    gammap = jnp.ones((1, Hp), f32).at[:, :H].set(gamma.reshape(1, H).astype(f32))
    betap = jnp.zeros((1, Hp), f32).at[:, :H].set(beta.reshape(1, H).astype(f32))
    return {
        "dims": (D, H, P, Dp, Hp, Pp),
        "w1p": w1p, "w2p": w2p, "b2p": b2p, "gammap": gammap, "betap": betap,
    }


def mlp_forward(x, prepared, *, batch_tile=None):
    D, H, P, Dp, Hp, Pp = prepared["dims"]
    w1p, w2p = prepared["w1p"], prepared["w2p"]
    b2p, gammap, betap = prepared["b2p"], prepared["gammap"], prepared["betap"]

    B = x.shape[0]
    assert x.shape[1] == D
    f32, bf16 = jnp.float32, jnp.bfloat16

    # Generation-aware tiling: v5e/v6e (128 MiB VMEM) -> 512-row batch tiles,
    # v7x (64 MiB) -> 256-row tiles.
    vmem_phys = _device_vmem_bytes()
    vmem_cap = min(3 * vmem_phys // 4, 100 * 1024 * 1024)
    if batch_tile is None:
        batch_tile = 512 if vmem_phys >= 100 * 1024 * 1024 else 256
    if B >= NCORES * batch_tile:
        TB = batch_tile
    else:
        TB = max(SUBLANE, _round_up(_cdiv(B, NCORES), SUBLANE))
    n_bt_total = _cdiv(B, TB)
    npc = _cdiv(n_bt_total, NCORES)          # batch tiles per core
    Bp = NCORES * npc * TB

    # x is consumed only as a bf16 MXU operand: pad + cast once here.
    if Bp == B and Dp == D:
        xp = x.astype(bf16)
    else:
        xp = jnp.zeros((Bp, Dp), bf16).at[:B, :D].set(x.astype(bf16))

    # ---- pass 1: tiled Linear-1 + per-core batch statistics ----
    est1 = (2 * TB * Dp * 2                  # x tile, double-buffered, bf16
            + Dp * Hp * 2                    # w1, grid-invariant -> counted once
            + 2 * TB * Hp * 2                # h tile out, double-buffered, bf16
            + 2 * 2 * SUBLANE * Hp * 4)      # sum/sumsq accumulator blocks
    vmem1 = _vmem_limit_bytes(est1, vmem_cap)

    h, part_sum, part_sumsq = pl.pallas_call(
        _linear1_stats_kernel,
        out_shape=(
            jax.ShapeDtypeStruct((Bp, Hp), bf16),
            jax.ShapeDtypeStruct((NCORES * SUBLANE, Hp), f32),
            jax.ShapeDtypeStruct((NCORES * SUBLANE, Hp), f32),
        ),
        grid=(NCORES, npc),
        in_specs=[
            pl.BlockSpec((TB, Dp), lambda c, i: (c * npc + i, 0)),
            pl.BlockSpec((Dp, Hp), lambda c, i: (0, 0)),         # weights resident
        ],
        out_specs=(
            pl.BlockSpec((TB, Hp), lambda c, i: (c * npc + i, 0)),
            pl.BlockSpec((SUBLANE, Hp), lambda c, i: (c, 0)),    # per-core accumulators
            pl.BlockSpec((SUBLANE, Hp), lambda c, i: (c, 0)),
        ),
        compiler_params=pltpu.CompilerParams(
            dimension_semantics=("parallel", "arbitrary"),       # stats accumulate over batch
            vmem_limit_bytes=vmem1,
        ),
    )(xp, w1p)

    # ---- tiny (1, Hp) work: reduce per-core partials, fold BN into scale/shift ----
    col_sum = jnp.sum(part_sum[::SUBLANE, :], axis=0, keepdims=True)
    col_sumsq = jnp.sum(part_sumsq[::SUBLANE, :], axis=0, keepdims=True)
    inv_b = 1.0 / B                                              # real batch (padded rows add 0)
    mean = col_sum * inv_b
    var = jnp.maximum(col_sumsq * inv_b - mean * mean, 0.0)      # guard E[x^2]-mean^2 cancellation
    scale = gammap * lax.rsqrt(var + BN_EPS)
    shift = betap - mean * scale

    # ---- pass 2: BN + ReLU + Linear-2, batch-parallel ----
    est2 = (2 * TB * Hp * 2                  # h tile in, bf16, double-buffered
            + Hp * Pp * 2                    # w2 resident
            + 2 * Hp * 4 + Pp * 4            # scale/shift/b2 (invariant)
            + 2 * TB * Pp * 4)               # out tile, f32
    vmem2 = _vmem_limit_bytes(est2, vmem_cap)

    outp = pl.pallas_call(
        _bn_relu_linear2_kernel,
        out_shape=jax.ShapeDtypeStruct((Bp, Pp), f32),
        grid=(Bp // TB,),
        in_specs=[
            pl.BlockSpec((TB, Hp), lambda i: (i, 0)),
            pl.BlockSpec((1, Hp), lambda i: (0, 0)),
            pl.BlockSpec((1, Hp), lambda i: (0, 0)),
            pl.BlockSpec((Hp, Pp), lambda i: (0, 0)),
            pl.BlockSpec((1, Pp), lambda i: (0, 0)),
        ],
        out_specs=pl.BlockSpec((TB, Pp), lambda i: (i, 0)),
        compiler_params=pltpu.CompilerParams(
            dimension_semantics=("parallel",),                   # shard batch across TCs
            vmem_limit_bytes=vmem2,
        ),
    )(h, scale, shift, w2p, b2p)

    return outp[:B, :P]


def init_params(key, dim, hidden_size, projection_size):
    k1, k2, k3, k4 = jax.random.split(key, 4)
    lim1 = 1.0 / jnp.sqrt(dim)
    lim2 = 1.0 / jnp.sqrt(hidden_size)
    w1 = jax.random.uniform(k1, (dim, hidden_size), jnp.float32, -lim1, lim1)
    b1 = jax.random.uniform(k2, (1, hidden_size), jnp.float32, -lim1, lim1)
    w2 = jax.random.uniform(k3, (hidden_size, projection_size), jnp.float32, -lim2, lim2)
    b2 = jax.random.uniform(k4, (1, projection_size), jnp.float32, -lim2, lim2)
    gamma = jnp.ones((1, hidden_size), jnp.float32)
    beta = jnp.zeros((1, hidden_size), jnp.float32)
    return w1, b1, gamma, beta, w2, b2


def mlp_reference(x, w1, b1, gamma, beta, w2, b2):
    # Pure f32 reference of the PyTorch forward (training-mode BatchNorm).
    h = x @ w1 + b1
    mean = jnp.mean(h, axis=0, keepdims=True)
    var = jnp.mean((h - mean) ** 2, axis=0, keepdims=True)
    h = (h - mean) * lax.rsqrt(var + BN_EPS) * gamma + beta
    h = jnp.maximum(h, 0.0)
    return h @ w2 + b2


if __name__ == "__main__":
    # Small shapes consistent with MLP(dim, projection_size, hidden_size).
    B, DIM, HIDDEN, PROJ = 8, 32, 64, 16

    key = jax.random.PRNGKey(0)
    kx, kp = jax.random.split(key)
    x = jax.random.normal(kx, (B, DIM), jnp.float32)
    params = init_params(kp, DIM, HIDDEN, PROJ)

    prepared = prepare_params(*params)       # one-time weight pad/cast (cache & reuse)
    out = mlp_forward(x, prepared)
    jax.block_until_ready(out)

    ref = mlp_reference(x, *params)
    assert out.shape == (B, PROJ)
    # bf16 MXU operands + bf16-stored intermediate with f32 accumulation:
    # compare with a bf16-level tolerance.
    assert jnp.allclose(out, ref, atol=5e-2, rtol=5e-2)

    print("KERNEL_OK")
</pallas_src>

<mosaic_0001>
module attributes {stable_mosaic.version = 11 : i64} {
  func.func @_linear1_stats_kernel(%arg0: i32, %arg1: i32, %arg2: memref<8x128xbf16, #tpu.memory_space<vmem>>, %arg3: memref<128x128xbf16, #tpu.memory_space<vmem>>, %arg4: memref<8x128xbf16, #tpu.memory_space<vmem>>, %arg5: memref<8x128xf32, #tpu.memory_space<vmem>>, %arg6: memref<8x128xf32, #tpu.memory_space<vmem>>) attributes {dimension_semantics = [#tpu.dimension_semantics<parallel>, #tpu.dimension_semantics<arbitrary>], iteration_bounds = array<i64: 2, 1>, scalar_prefetch = 0 : i64, scratch_operands = 0 : i64, tpu.core_type = #tpu.core_type<tc>, window_params = [{transform_indices = @transform_0, window_bounds = array<i64: 8, 128>}, {pipeline_mode = #tpu.pipeline_mode<synchronous>, transform_indices = @transform_1, window_bounds = array<i64: 128, 128>}, {transform_indices = @transform_2, window_bounds = array<i64: 8, 128>}, {transform_indices = @transform_3, window_bounds = array<i64: 8, 128>}, {transform_indices = @transform_4, window_bounds = array<i64: 8, 128>}]} {
    %c0_i32 = arith.constant 0 : i32
    %0 = arith.cmpi eq, %arg1, %c0_i32 : i32
    %1 = arith.extui %0 : i1 to i32
    %c0_i32_0 = arith.constant 0 : i32
    %2 = arith.cmpi ne, %1, %c0_i32_0 : i32
    scf.if %2 {
      %cst_16 = arith.constant 0.000000e+00 : f32
      %21 = vector.broadcast %cst_16 : f32 to vector<8x128xf32>
      %c0_17 = arith.constant 0 : index
      %c0_18 = arith.constant 0 : index
      %22 = vector.load %arg5[%c0_17, %c0_18] : memref<8x128xf32, #tpu.memory_space<vmem>>, vector<8x128xf32>
      tpu.vector_store %arg5[%c0_17, %c0_18], %21 {strides = array<i32>} : memref<8x128xf32, #tpu.memory_space<vmem>>, vector<8x128xf32>,
      %cst_19 = arith.constant 0.000000e+00 : f32
      %23 = vector.broadcast %cst_19 : f32 to vector<8x128xf32>
      %c0_20 = arith.constant 0 : index
      %c0_21 = arith.constant 0 : index
      %24 = vector.load %arg6[%c0_20, %c0_21] : memref<8x128xf32, #tpu.memory_space<vmem>>, vector<8x128xf32>
      tpu.vector_store %arg6[%c0_20, %c0_21], %23 {strides = array<i32>} : memref<8x128xf32, #tpu.memory_space<vmem>>, vector<8x128xf32>,
    } else {
    }
    %c0 = arith.constant 0 : index
    %c0_1 = arith.constant 0 : index
    %3 = vector.load %arg2[%c0, %c0_1] : memref<8x128xbf16, #tpu.memory_space<vmem>>, vector<8x128xbf16>
    %c0_2 = arith.constant 0 : index
    %c0_3 = arith.constant 0 : index
    %4 = vector.load %arg3[%c0_2, %c0_3] : memref<128x128xbf16, #tpu.memory_space<vmem>>, vector<128x128xbf16>
    %cst = arith.constant dense<0.000000e+00> : vector<8x128xf32>
    %5 = tpu.matmul %3, %4, %cst {dimension_numbers = #tpu.dot_dimension_numbers<[1], [0], [0], [1], [0, 0, 1, 1], [], []>} : vector<8x128xbf16>, vector<128x128xbf16>, vector<8x128xf32> -> vector<8x128xf32>
    %6 = arith.truncf %5 : vector<8x128xf32> to vector<8x128xbf16>
    %c0_4 = arith.constant 0 : index
    %c0_5 = arith.constant 0 : index
    %7 = vector.load %arg4[%c0_4, %c0_5] : memref<8x128xbf16, #tpu.memory_space<vmem>>, vector<8x128xbf16>
    tpu.vector_store %arg4[%c0_4, %c0_5], %6 {strides = array<i32>} : memref<8x128xbf16, #tpu.memory_space<vmem>>, vector<8x128xbf16>,
    %c0_6 = arith.constant 0 : index
    %c0_7 = arith.constant 0 : index
    %8 = vector.load %arg5[%c0_6, %c0_7] : memref<8x128xf32, #tpu.memory_space<vmem>>, vector<8x128xf32>
    %cst_8 = arith.constant dense<0.000000e+00> : vector<128xf32>
    %9 = vector.multi_reduction <add>, %5, %cst_8 [0] : vector<8x128xf32> to vector<128xf32>
    %10 = vector.shape_cast %9 : vector<128xf32> to vector<1x128xf32>
    %11 = vector.broadcast %10 : vector<1x128xf32> to vector<8x128xf32>
    %12 = arith.addf %8, %11 : vector<8x128xf32>
    %c0_9 = arith.constant 0 : index
    %c0_10 = arith.constant 0 : index
    %13 = vector.load %arg5[%c0_9, %c0_10] : memref<8x128xf32, #tpu.memory_space<vmem>>, vector<8x128xf32>
    tpu.vector_store %arg5[%c0_9, %c0_10], %12 {strides = array<i32>} : memref<8x128xf32, #tpu.memory_space<vmem>>, vector<8x128xf32>,
    %c0_11 = arith.constant 0 : index
    %c0_12 = arith.constant 0 : index
    %14 = vector.load %arg6[%c0_11, %c0_12] : memref<8x128xf32, #tpu.memory_space<vmem>>, vector<8x128xf32>
    %15 = arith.mulf %5, %5 : vector<8x128xf32>
    %cst_13 = arith.constant dense<0.000000e+00> : vector<128xf32>
    %16 = vector.multi_reduction <add>, %15, %cst_13 [0] : vector<8x128xf32> to vector<128xf32>
    %17 = vector.shape_cast %16 : vector<128xf32> to vector<1x128xf32>
    %18 = vector.broadcast %17 : vector<1x128xf32> to vector<8x128xf32>
    %19 = arith.addf %14, %18 : vector<8x128xf32>
    %c0_14 = arith.constant 0 : index
    %c0_15 = arith.constant 0 : index
    %20 = vector.load %arg6[%c0_14, %c0_15] : memref<8x128xf32, #tpu.memory_space<vmem>>, vector<8x128xf32>
    tpu.vector_store %arg6[%c0_14, %c0_15], %19 {strides = array<i32>} : memref<8x128xf32, #tpu.memory_space<vmem>>, vector<8x128xf32>,
    return
  }
  func.func @transform_0(%arg0: i32, %arg1: i32) -> (i32, i32) {
    %c1_i32 = arith.constant 1 : i32
    %0 = arith.muli %arg0, %c1_i32 : i32
    %1 = arith.addi %0, %arg1 : i32
    %c0_i32 = arith.constant 0 : i32
    %c0_i32_0 = arith.constant 0 : i32
    return %1, %c0_i32 : i32, i32
  }
  func.func @transform_1(%arg0: i32, %arg1: i32) -> (i32, i32) {
    %c0_i32 = arith.constant 0 : i32
    %c0_i32_0 = arith.constant 0 : i32
    %c0_i32_1 = arith.constant 0 : i32
    return %c0_i32, %c0_i32_0 : i32, i32
  }
  func.func @transform_2(%arg0: i32, %arg1: i32) -> (i32, i32) {
    %c1_i32 = arith.constant 1 : i32
    %0 = arith.muli %arg0, %c1_i32 : i32
    %1 = arith.addi %0, %arg1 : i32
    %c0_i32 = arith.constant 0 : i32
    %c0_i32_0 = arith.constant 0 : i32
    return %1, %c0_i32 : i32, i32
  }
  func.func @transform_3(%arg0: i32, %arg1: i32) -> (i32, i32) {
    %c0_i32 = arith.constant 0 : i32
    %c0_i32_0 = arith.constant 0 : i32
    return %arg0, %c0_i32 : i32, i32
  }
  func.func @transform_4(%arg0: i32, %arg1: i32) -> (i32, i32) {
    %c0_i32 = arith.constant 0 : i32
    %c0_i32_0 = arith.constant 0 : i32
    return %arg0, %c0_i32 : i32, i32
  }
}

</mosaic_0001>

<llo_original>
// kernel: tpu_custom_call.1
$region0: #{tpu_custom_call.1}
  #allocation0 [shape = 'u32[]', space=smem, size = 0x4, offset = 0x4, fixed_abs, tag = 'smem constant byte address 0x4 - core index']
  #allocation1 [shape = 'u32[144,128]{1,0:T(1,128)}', space=vmem, size = 0x12000, scoped, tag = 'internal scratch']
  %s0 = inlined_call_operand.hbm [shape: bf16[16,128], index: 0, kind: input, shape index: {}]
  %s1 = inlined_call_operand.hbm [shape: bf16[128,128], index: 1, kind: input, shape index: {}]
  %s2 = inlined_call_operand.hbm [shape: bf16[16,128], index: 2, kind: output, shape index: {0}]
  %s3 = inlined_call_operand.hbm [shape: f32[16,128], index: 3, kind: output, shape index: {1}]
  %s4 = inlined_call_operand.hbm [shape: f32[16,128], index: 4, kind: output, shape index: {2}]
  %5 = xla_tuple %s2, %s3, %s4
  %s6 = sld [smem:[#allocation0]]
  $region69: #{tpu_custom_call.1} parent=0
    _
  %s8 = ssub.s32 1, %s6
  %s9 = scalar_select 0, %s8, %s6
  $region1: #{tpu_custom_call.1} parent=0
    #allocation2 [shape = 'u8[4096]{0}', space=vmem, size = 0x1000, scoped, tag = 'input window, operand 0']
    #allocation3 [shape = 's32[2]{0}', space=sflag, size = 0x8, scoped, tag = 'scoped memory for tpu_custom_call.1']
    #allocation4 [shape = 's32[2]{0}', space=sflag, size = 0x8, scoped, tag = 'scoped memory for tpu_custom_call.1']
    #allocation5 [shape = 'u8[32768]{0}', space=vmem, size = 0x8000, scoped, tag = 'input window, operand 1, single buffered']
    #allocation6 [shape = 's32[1]{0}', space=sflag, size = 0x4, scoped, tag = 'scoped memory for tpu_custom_call.1']
    #allocation7 [shape = 'u8[4096]{0}', space=vmem, size = 0x1000, scoped, tag = 'output window, operand 0']
    #allocation8 [shape = 'u8[8192]{0}', space=vmem, size = 0x2000, scoped, tag = 'output window, operand 1']
    #allocation9 [shape = 's32[2]{0}', space=sflag, size = 0x8, scoped, tag = 'scoped memory for tpu_custom_call.1']
    #allocation10 [shape = 'u8[8192]{0}', space=vmem, size = 0x2000, scoped, tag = 'output window, operand 2']
    %10 = vsyncpa [#allocation3], 0
    %s11 = scalar_lea.sflag [#allocation3], 1
    %12 = vsyncpa %s11, 0
    %13 = vsyncpa [#allocation6], 0
    %14 = vsyncpa [#allocation4], 0
    %s15 = scalar_lea.sflag [#allocation4], 1
    %16 = vsyncpa %s15, 0
    %17 = vsyncpa [#allocation9], 0
    %s18 = scalar_lea.sflag [#allocation9], 1
    %19 = vsyncpa %s18, 0
    loop: start=0, step=1, limit=4
    $region2: #{tpu_custom_call.1} parent=1 // loop_pre_header
      _
    $region3: #{tpu_custom_call.1} parent=1 // loop_header
      %s21 = sphi 0, %s25
      %p22 = scmp.ge.s32.totalorder %s21, 4
      %s28 = sphi 0, %s40
      %s29 = sphi 0, %s36
      %s30 = sphi 0, %s28
      %s31 = sphi 0, %s29
      %s32 = sphi 0, %s30
      %s33 = sphi 0, %s31
      %s45 = sphi 0, %s47
      %s48 = sphi 0, %s45
      %s49 = sphi 0, %s48
      %s65 = sphi 0, %s49
      %s69 = sphi 0, %s69
      %s71 = sphi 0, %s69
      %s72 = sphi 0, %s71
      %s86 = sphi 0, %s72
      %s94 = sphi 0, %s96
      %s97 = sphi 0, %s94
      %s98 = sphi 0, %s97
      %s114 = sphi 0, %s98
      %s120 = sphi 0, %s122
      %s123 = sphi 0, %s120
      %s124 = sphi 0, %s123
      %s140 = sphi 0, %s124
      %s146 = sphi 0, %s148
      %s149 = sphi 0, %s146
      %s150 = sphi 0, %s149
      %s166 = sphi 0, %s150
    $region4: #{tpu_custom_call.1} parent=1 // loop_header_branch
      %24 = sbr.rel (%p22) target = $region8
    $region5: #{tpu_custom_call.1} parent=1 // loop_body
      %s26 = ssub.s32 %s21, 1
      %s27 = ssub.s32 %s21, 2
      %s34 = sadd.s32 1, %s29
      %p35 = scmp.ge.s32.totalorder %s34, 1
      %s36 = scalar_select %p35, 0, %s34
      %s37 = sadd.s32 1, %s28
      %s38 = scalar_select %p35, %s37, %s28
      %p39 = scmp.ge.s32.totalorder %s38, 2
      %s40 = scalar_select %p39, 0, %s38
      %s41 = sadd.s32 %s28, %s29
      %s42 = sadd.s32 %s40, %s36
      %s43 = ssub.s32 %s41, %s42
      %p44 = scmp.eq.s32.totalorder %s43, 0
      %s46 = sadd.s32 %s45, 1
      %s47 = scalar_select %p44, %s45, %s46
      %p50 = pneg %p44
      %p51 = scmp.eq.s32.totalorder %s21, 1
      %p52 = por %p50, %p51
      %p53 = scmp.ne.s32.totalorder %s45, %s48
      %p54 = scmp.eq.s32.totalorder %s21, 0
      %p55 = por %p53, %p54
      %p56 = scmp.ne.s32.totalorder %s45, %s48
      %p57 = scmp.eq.s32.totalorder %s26, 1
      %p58 = por %p56, %p57
      %p59 = scmp.ne.s32.totalorder %s48, %s49
      %p60 = scmp.eq.s32.totalorder %s26, 0
      %p61 = por %p59, %p60
      %p62 = scmp.ne.s32.totalorder %s48, %s49
      %p63 = scmp.eq.s32.totalorder %s27, 1
      %p64 = por %p62, %p63
      %p66 = scmp.ne.s32.totalorder %s49, %s65
      %p67 = scmp.eq.s32.totalorder %s27, 0
      %p68 = por %p66, %p67
      %s70 = sadd.s32 %s69, 1
      %p73 = scmp.eq.s32.totalorder %s21, 1
      %p74 = scmp.ne.s32.totalorder %s69, %s71
      %p75 = scmp.eq.s32.totalorder %s21, 0
      %p76 = por %p74, %p75
      %p77 = scmp.ne.s32.totalorder %s69, %s71
      %p78 = scmp.eq.s32.totalorder %s26, 1
      %p79 = por %p77, %p78
      %p80 = scmp.ne.s32.totalorder %s71, %s72
      %p81 = scmp.eq.s32.totalorder %s26, 0
      %p82 = por %p80, %p81
      %p83 = scmp.ne.s32.totalorder %s71, %s72
      %p84 = scmp.eq.s32.totalorder %s27, 1
      %p85 = por %p83, %p84
      %p87 = scmp.ne.s32.totalorder %s72, %s86
      %p88 = scmp.eq.s32.totalorder %s27, 0
      %p89 = por %p87, %p88
      %s90 = sadd.s32 %s28, %s29
      %s91 = sadd.s32 %s40, %s36
      %s92 = ssub.s32 %s90, %s91
      %p93 = scmp.eq.s32.totalorder %s92, 0
      %s95 = sadd.s32 %s94, 1
      %s96 = scalar_select %p93, %s94, %s95
      %p99 = pneg %p93
      %p100 = scmp.eq.s32.totalorder %s21, 1
      %p101 = por %p99, %p100
      %p102 = scmp.ne.s32.totalorder %s94, %s97
      %p103 = scmp.eq.s32.totalorder %s21, 0
      %p104 = por %p102, %p103
      %p105 = scmp.ne.s32.totalorder %s94, %s97
      %p106 = scmp.eq.s32.totalorder %s26, 1
      %p107 = por %p105, %p106
      %p108 = scmp.ne.s32.totalorder %s97, %s98
      %p109 = scmp.eq.s32.totalorder %s26, 0
      %p110 = por %p108, %p109
      %p111 = scmp.ne.s32.totalorder %s97, %s98
      %p112 = scmp.eq.s32.totalorder %s27, 1
      %p113 = por %p111, %p112
      %p115 = scmp.ne.s32.totalorder %s98, %s114
      %p116 = scmp.eq.s32.totalorder %s27, 0
      %p117 = por %p115, %p116
      %s118 = ssub.s32 %s28, %s40
      %p119 = scmp.eq.s32.totalorder %s118, 0
      %s121 = sadd.s32 %s120, 1
      %s122 = scalar_select %p119, %s120, %s121
      %p125 = pneg %p119
      %p126 = scmp.eq.s32.totalorder %s21, 1
      %p127 = por %p125, %p126
      %p128 = scmp.ne.s32.totalorder %s120, %s123
      %p129 = scmp.eq.s32.totalorder %s21, 0
      %p130 = por %p128, %p129
      %p131 = scmp.ne.s32.totalorder %s120, %s123
      %p132 = scmp.eq.s32.totalorder %s26, 1
      %p133 = por %p131, %p132
      %p134 = scmp.ne.s32.totalorder %s123, %s124
      %p135 = scmp.eq.s32.totalorder %s26, 0
      %p136 = por %p134, %p135
      %p137 = scmp.ne.s32.totalorder %s123, %s124
      %p138 = scmp.eq.s32.totalorder %s27, 1
      %p139 = por %p137, %p138
      %p141 = scmp.ne.s32.totalorder %s124, %s140
      %p142 = scmp.eq.s32.totalorder %s27, 0
      %p143 = por %p141, %p142
      %s144 = ssub.s32 %s28, %s40
      %p145 = scmp.eq.s32.totalorder %s144, 0
      %s147 = sadd.s32 %s146, 1
      %s148 = scalar_select %p145, %s146, %s147
      %p151 = pneg %p145
      %p152 = scmp.eq.s32.totalorder %s21, 1
      %p153 = por %p151, %p152
      %p154 = scmp.ne.s32.totalorder %s146, %s149
      %p155 = scmp.eq.s32.totalorder %s21, 0
      %p156 = por %p154, %p155
      %p157 = scmp.ne.s32.totalorder %s146, %s149
      %p158 = scmp.eq.s32.totalorder %s26, 1
      %p159 = por %p157, %p158
      %p160 = scmp.ne.s32.totalorder %s149, %s150
      %p161 = scmp.eq.s32.totalorder %s26, 0
      %p162 = por %p160, %p161
      %p163 = scmp.ne.s32.totalorder %s149, %s150
      %p164 = scmp.eq.s32.totalorder %s27, 1
      %p165 = por %p163, %p164
      %p167 = scmp.ne.s32.totalorder %s150, %s166
      %p168 = scmp.eq.s32.totalorder %s27, 0
      %p169 = por %p167, %p168
      %p170 = scmp.le.s32.totalorder 1, %s21
      %p171 = scmp.lt.s32.totalorder %s21, 3
      %p172 = pnand %p170, %p171
      %p173 = pneg %p172
      // Predicated region
      $region9: #{tpu_custom_call.1} parent=5 // pred_check
        _
      $region10: #{tpu_custom_call.1} parent=5 // pred_check_branch
        %175 = sbr.rel (%p172) target = $region12
      $region11: #{tpu_custom_call.1} parent=5 // pred_region
        %s176 = ssub.s32 %s21, 1
        // Predicated region
        $region13: #{tpu_custom_call.1} parent=11 // pred_check
          %p177 = pneg %p82
        $region14: #{tpu_custom_call.1} parent=11 // pred_check_branch
          %179 = sbr.rel (%p177) target = $region16
        $region15: #{tpu_custom_call.1} parent=11 // pred_region
          %s181 = ssub.s32 1024, 1024
          %182 = vsyncadd [#allocation6], %s181
          %s183 = sshll.u32 [#allocation5], 4
          %s184 = int_to_ptr.vmem [resolvable:$true] %s183
          %189 = dma.hbm_to_vmem [thread:$0]  %s1, 1024, %s184, [#allocation6], 64, 64, 4
        $region16: #{tpu_custom_call.1} parent=11 // pred_fallthru
          _
      $region12: #{tpu_custom_call.1} parent=5 // pred_fallthru
        _
      %p190 = scmp.lt.s32.totalorder %s21, 2
      // Predicated region
      $region17: #{tpu_custom_call.1} parent=5 // pred_check
        %p191 = pneg %p190
      $region18: #{tpu_custom_call.1} parent=5 // pred_check_branch
        %193 = sbr.rel (%p191) target = $region20
      $region19: #{tpu_custom_call.1} parent=5 // pred_region
        // Predicated region
        $region21: #{tpu_custom_call.1} parent=19 // pred_check
          %p194 = pneg %p55
        $region22: #{tpu_custom_call.1} parent=19 // pred_check_branch
          %196 = sbr.rel (%p194) target = $region24
        $region23: #{tpu_custom_call.1} parent=19 // pred_region
          %s197 = sand.u32 %s45, 1
          %s198 = scalar_lea.sflag [#allocation3], %s197
          %s199 = sand.u32 %s45, 1
          %s200 = smul.addr %s199, 4
          %s201 = scalar_lea.vmem [#allocation2], %s200
          %s202 = sadd.s32 %s28, %s29
          %s204 = ssub.s32 64, 64
          %205 = vsyncadd %s198, %s204
          %s206 = smul.addr %s202, 64
          %s207 = scalar_lea.hbm %s0, %s206
          %s209 = sshll.u32 %s201, 4
          %s210 = int_to_ptr.vmem [resolvable:$true] %s209
          %212 = dma.hbm_to_vmem [thread:$0]  %s207, 64, %s210, %s198
        $region24: #{tpu_custom_call.1} parent=19 // pred_fallthru
          _
      $region20: #{tpu_custom_call.1} parent=5 // pred_fallthru
        _
      %p213 = scmp.le.s32.totalorder 1, %s21
      %p214 = scmp.lt.s32.totalorder %s21, 3
      %p215 = pnand %p213, %p214
      %p216 = pneg %p215
      // Predicated region
      $region25: #{tpu_custom_call.1} parent=5 // pred_check
        _
      $region26: #{tpu_custom_call.1} parent=5 // pred_check_branch
        %218 = sbr.rel (%p215) target = $region28
      $region27: #{tpu_custom_call.1} parent=5 // pred_region
        %s219 = ssub.s32 %s21, 1
        %s220 = sand.u32 %s48, 1
        %s221 = scalar_lea.sflag [#allocation3], %s220
        %s222 = sand.u32 %s48, 1
        %s223 = smul.addr %s222, 4
        %s224 = scalar_lea.vmem [#allocation2], %s223
        // Predicated region
        $region29: #{tpu_custom_call.1} parent=27 // pred_check
          %p225 = pneg %p61
        $region30: #{tpu_custom_call.1} parent=27 // pred_check_branch
          %227 = sbr.rel (%p225) target = $region32
        $region31: #{tpu_custom_call.1} parent=27 // pred_region
          %228 = dma.done %s221, 64
        $region32: #{tpu_custom_call.1} parent=27 // pred_fallthru
          _
        // Predicated region
        $region33: #{tpu_custom_call.1} parent=27 // pred_check
          %p229 = pneg %p82
        $region34: #{tpu_custom_call.1} parent=27 // pred_check_branch
          %231 = sbr.rel (%p229) target = $region36
        $region35: #{tpu_custom_call.1} parent=27 // pred_region
          %232 = dma.done [#allocation6], 1024
        $region36: #{tpu_custom_call.1} parent=27 // pred_fallthru
          _
        %s233 = sand.u32 %s48, 1
        %s234 = scalar_lea.sflag [#allocation3], %s233
        %s235 = sand.u32 %s48, 1
        %s236 = smul.addr %s235, 4
        %s237 = scalar_lea.vmem [#allocation2], %s236
        %p238 = pneg %p61
        %p239 = pneg %p58
        %p240 = pneg %p82
        %p241 = pneg %p79
        %p242 = pneg %p110
        %p243 = pneg %p107
        %s244 = sand.u32 %s97, 1
        %s245 = scalar_lea.sflag [#allocation4], %s244
        %s246 = sand.u32 %s97, 1
        %s247 = smul.addr %s246, 4
        %s248 = scalar_lea.vmem [#allocation7], %s247
        %p249 = pneg %p136
        %p250 = pneg %p133
        %s251 = sand.u32 %s26, 1
        %s252 = scalar_lea.sflag [#allocation9], %s251
        %s253 = sand.u32 %s123, 1
        %s254 = smul.addr %s253, 8
        %s255 = scalar_lea.vmem [#allocation8], %s254
        %p256 = pneg %p162
        %p257 = pneg %p159
        %s258 = sand.u32 %s26, 1
        %s259 = scalar_lea.sflag [#allocation9], %s258
        %s260 = sand.u32 %s149, 1
        %s261 = smul.addr %s260, 8
        %s262 = scalar_lea.vmem [#allocation10], %s261
        %s263 = sadd.s32 %s30, %s31
        %s264 = sadd.s32 %s30, %s31
        %p266 = scmp.eq.s32.totalorder %s31, 0
        // Predicated region
        $region37: #{tpu_custom_call.1} parent=27 // pred_check
          %p267 = pneg %p266
        $region38: #{tpu_custom_call.1} parent=27 // pred_check_branch
          %269 = sbr.rel (%p267) target = $region40
        $region39: #{tpu_custom_call.1} parent=27 // pred_region
          %270 = vst [vmem:[%s255] sm:$0xff] 0.0
          %271 = vst [vmem:[%s262] sm:$0xff] 0.0
        $region40: #{tpu_custom_call.1} parent=27 // pred_fallthru
          _
        %v272 = vld [vmem:[%s224] sm:$0xf]
        %v273 = vld [vmem:[#allocation5] sm:$0xf]
        %v274 = vld [vmem:[#allocation5 + $0x4] sm:$0xf]
        %v275 = vld [vmem:[#allocation5 + $0x8] sm:$0xf]
        %v276 = vld [vmem:[#allocation5 + $0xc] sm:$0xf]
        %v277 = vld [vmem:[#allocation5 + $0x10] sm:$0xf]
        %v278 = vld [vmem:[#allocation5 + $0x14] sm:$0xf]
        %v279 = vld [vmem:[#allocation5 + $0x18] sm:$0xf]
        %v280 = vld [vmem:[#allocation5 + $0x1c] sm:$0xf]
        %v281 = vld [vmem:[#allocation5 + $0x20] sm:$0xf]
        %v282 = vld [vmem:[#allocation5 + $0x24] sm:$0xf]
        %v283 = vld [vmem:[#allocation5 + $0x28] sm:$0xf]
        %v284 = vld [vmem:[#allocation5 + $0x2c] sm:$0xf]
        %v285 = vld [vmem:[#allocation5 + $0x30] sm:$0xf]
        %v286 = vld [vmem:[#allocation5 + $0x34] sm:$0xf]
        %v287 = vld [vmem:[#allocation5 + $0x38] sm:$0xf]
        %v288 = vld [vmem:[#allocation5 + $0x3c] sm:$0xf]
        %v305 = vunpack.c.l.b16 %v273
        %v306 = vunpack.c.l.b16 %v274
        %v307 = vunpack.c.l.b16 %v275
        %v308 = vunpack.c.l.b16 %v276
        %v309 = vunpack.c.l.b16 %v277
        %v310 = vunpack.c.l.b16 %v278
        %v311 = vunpack.c.l.b16 %v279
        %v312 = vunpack.c.l.b16 %v280
        %v313 = vunpack.c.l.b16 %v281
        %v314 = vunpack.c.l.b16 %v282
        %v315 = vunpack.c.l.b16 %v283
        %v316 = vunpack.c.l.b16 %v284
        %v317 = vunpack.c.l.b16 %v285
        %v318 = vunpack.c.l.b16 %v286
        %v319 = vunpack.c.l.b16 %v287
        %v320 = vunpack.c.l.b16 %v288
        %v321 = vpack.c.b16 %v306, %v305
        %v322 = vpack.c.b16 %v308, %v307
        %v323 = vpack.c.b16 %v310, %v309
        %v324 = vpack.c.b16 %v312, %v311
        %v325 = vpack.c.b16 %v314, %v313
        %v326 = vpack.c.b16 %v316, %v315
        %v327 = vpack.c.b16 %v318, %v317
        %v328 = vpack.c.b16 %v320, %v319
        %337 = vmatprep.subr.bf16.mxu0 0
        %338 = vmatpush1.bf16.msra.mxu0 %v321
        %339 = vmatprep.subr.bf16.mxu0 0
        %340 = vmatpush1.bf16.msra.mxu0 %v322
        %341 = vmatprep.subr.bf16.mxu0 0
        %342 = vmatpush1.bf16.msra.mxu0 %v323
        %343 = vmatprep.subr.bf16.mxu0 0
        %344 = vmatpush1.bf16.msra.mxu0 %v324
        %345 = vmatprep.subr.bf16.mxu0 0
        %346 = vmatpush1.bf16.msra.mxu0 %v325
        %347 = vmatprep.subr.bf16.mxu0 0
        %348 = vmatpush1.bf16.msra.mxu0 %v326
        %349 = vmatprep.subr.bf16.mxu0 0
        %350 = vmatpush1.bf16.msra.mxu0 %v327
        %351 = vmatprep.subr.bf16.mxu0 0
        %352 = vmatpush1.bf16.msra.mxu0 %v328
        %353 = vmatprep.subr.bf16.mxu0 0
        %354 = vmatpush1.bf16.msra.mxu0 0
        %355 = vmatprep.subr.bf16.mxu0 0
        %356 = vmatpush1.bf16.msra.mxu0 0
        %357 = vmatprep.subr.bf16.mxu0 0
        %358 = vmatpush1.bf16.msra.mxu0 0
        %359 = vmatprep.subr.bf16.mxu0 0
        %360 = vmatpush1.bf16.msra.mxu0 0
        %361 = vmatprep.subr.bf16.mxu0 0
        %362 = vmatpush1.bf16.msra.mxu0 0
        %363 = vmatprep.subr.bf16.mxu0 0
        %364 = vmatpush1.bf16.msra.mxu0 0
        %365 = vmatprep.subr.bf16.mxu0 0
        %366 = vmatpush1.bf16.msra.mxu0 0
        %367 = vmatprep.subr.bf16.mxu0 0
        %368 = vmatpush1.bf16.msra.mxu0 0
        %369 = vmatprep.mubr.bf16.mxu0 0
        %370 = vmatmul.mubr.bf16.gmra.mrb[0].mxu0 %v272
        %v371 = vpop.f32.mrb[0].mxu0
        %v372 = vadd.f32 0.0, %v371
        %v373 = vpop.f32.mrb[0].mxu0
        %v374 = vpop.f32.mrb[0].mxu0
        %v375 = vpop.f32.mrb[0].mxu0
        %376 = vdwg.mxu0
        %v377 = vpack.c.bf16 %v372, %v372
        %378 = vst [vmem:[%s248] sm:$0xf] %v377
        %v379 = vld [vmem:[%s255] sm:$0xff]
        %v380 = vrot.slane %v372, 4
        %v381 = vadd.f32 %v372, %v380
        %v382 = vrot.slane %v381, 2
        %v383 = vadd.f32 %v381, %v382
        %v384 = vrot.slane %v383, 1
        %v385 = vadd.f32 %v383, %v384
        %v386 = vadd.f32 %v379, %v385
        %387 = vst [vmem:[%s255] sm:$0xff] %v386
        %v388 = vld [vmem:[%s262] sm:$0xff]
        %v389 = vmul.f32 %v372, %v372
        %v390 = vrot.slane %v389, 4
        %v391 = vadd.f32 %v389, %v390
        %v392 = vrot.slane %v391, 2
        %v393 = vadd.f32 %v391, %v392
        %v394 = vrot.slane %v393, 1
        %v395 = vadd.f32 %v393, %v394
        %v396 = vadd.f32 %v388, %v395
        %397 = vst [vmem:[%s262] sm:$0xff] %v396
        %s398 = sand.u32 %s97, 1
        %s399 = scalar_lea.sflag [#allocation4], %s398
        %s400 = sand.u32 %s97, 1
        %s401 = smul.addr %s400, 4
        %s402 = scalar_lea.vmem [#allocation7], %s401
        %s403 = sand.u32 %s26, 1
        %s404 = scalar_lea.sflag [#allocation9], %s403
        %s405 = sand.u32 %s123, 1
        %s406 = smul.addr %s405, 8
        %s407 = scalar_lea.vmem [#allocation8], %s406
        %s408 = sand.u32 %s26, 1
        %s409 = scalar_lea.sflag [#allocation9], %s408
        %s410 = sand.u32 %s149, 1
        %s411 = smul.addr %s410, 8
        %s412 = scalar_lea.vmem [#allocation10], %s411
        // Predicated region
        $region41: #{tpu_custom_call.1} parent=27 // pred_check
          %p413 = pneg %p107
        $region42: #{tpu_custom_call.1} parent=27 // pred_check_branch
          %415 = sbr.rel (%p413) target = $region44
        $region43: #{tpu_custom_call.1} parent=27 // pred_region
          %s416 = sadd.s32 %s30, %s31
          %s418 = ssub.s32 64, 64
          %419 = vsyncadd %s399, %s418
          %s420 = smul.addr %s416, 64
          %s421 = scalar_lea.hbm %s2, %s420
          %s423 = sshll.u32 %s402, 4
          %s424 = int_to_ptr.vmem [resolvable:$true] %s423
          %426 = dma.vmem_to_hbm [thread:$0]  %s424, 64, %s421, %s399
        $region44: #{tpu_custom_call.1} parent=27 // pred_fallthru
          _
        // Predicated region
        $region45: #{tpu_custom_call.1} parent=27 // pred_check
          %p427 = pneg %p133
        $region46: #{tpu_custom_call.1} parent=27 // pred_check_branch
          %429 = sbr.rel (%p427) target = $region48
        $region47: #{tpu_custom_call.1} parent=27 // pred_region
          %s431 = ssub.s32 128, 128
          %432 = vsyncadd %s404, %s431
          %s433 = smul.addr %s30, 128
          %s434 = scalar_lea.hbm %s3, %s433
          %s436 = sshll.u32 %s407, 4
          %s437 = int_to_ptr.vmem [resolvable:$true] %s436
          %439 = dma.vmem_to_hbm [thread:$0]  %s437, 128, %s434, %s404
        $region48: #{tpu_custom_call.1} parent=27 // pred_fallthru
          _
        // Predicated region
        $region49: #{tpu_custom_call.1} parent=27 // pred_check
          %p440 = pneg %p159
        $region50: #{tpu_custom_call.1} parent=27 // pred_check_branch
          %442 = sbr.rel (%p440) target = $region52
        $region51: #{tpu_custom_call.1} parent=27 // pred_region
          %s444 = ssub.s32 128, 128
          %445 = vsyncadd %s409, %s444
          %s446 = smul.addr %s30, 128
          %s447 = scalar_lea.hbm %s4, %s446
          %s449 = sshll.u32 %s412, 4
          %s450 = int_to_ptr.vmem [resolvable:$true] %s449
          %452 = dma.vmem_to_hbm [thread:$0]  %s450, 128, %s447, %s409
        $region52: #{tpu_custom_call.1} parent=27 // pred_fallthru
          _
      $region28: #{tpu_custom_call.1} parent=5 // pred_fallthru
        _
      %p453 = scmp.le.s32.totalorder 2, %s21
      // Predicated region
      $region53: #{tpu_custom_call.1} parent=5 // pred_check
        %p454 = pneg %p453
      $region54: #{tpu_custom_call.1} parent=5 // pred_check_branch
        %456 = sbr.rel (%p454) target = $region56
      $region55: #{tpu_custom_call.1} parent=5 // pred_region
        %s457 = ssub.s32 %s21, 2
        // Predicated region
        $region57: #{tpu_custom_call.1} parent=55 // pred_check
          %p458 = pneg %p113
        $region58: #{tpu_custom_call.1} parent=55 // pred_check_branch
          %460 = sbr.rel (%p458) target = $region60
        $region59: #{tpu_custom_call.1} parent=55 // pred_region
          %s461 = sand.u32 %s98, 1
          %s462 = scalar_lea.sflag [#allocation4], %s461
          %s463 = sand.u32 %s98, 1
          %s464 = smul.addr %s463, 4
          %s465 = scalar_lea.vmem [#allocation7], %s464
          %466 = dma.done %s462, 64
        $region60: #{tpu_custom_call.1} parent=55 // pred_fallthru
          _
        // Predicated region
        $region61: #{tpu_custom_call.1} parent=55 // pred_check
          %p467 = pneg %p139
        $region62: #{tpu_custom_call.1} parent=55 // pred_check_branch
          %469 = sbr.rel (%p467) target = $region64
        $region63: #{tpu_custom_call.1} parent=55 // pred_region
          %s470 = sand.u32 %s27, 1
          %s471 = scalar_lea.sflag [#allocation9], %s470
          %s472 = sand.u32 %s124, 1
          %s473 = smul.addr %s472, 8
          %s474 = scalar_lea.vmem [#allocation8], %s473
          %475 = dma.done %s471, 128
        $region64: #{tpu_custom_call.1} parent=55 // pred_fallthru
          _
        // Predicated region
        $region65: #{tpu_custom_call.1} parent=55 // pred_check
          %p476 = pneg %p165
        $region66: #{tpu_custom_call.1} parent=55 // pred_check_branch
          %478 = sbr.rel (%p476) target = $region68
        $region67: #{tpu_custom_call.1} parent=55 // pred_region
          %s479 = sand.u32 %s27, 1
          %s480 = scalar_lea.sflag [#allocation9], %s479
          %s481 = sand.u32 %s150, 1
          %s482 = smul.addr %s481, 8
          %s483 = scalar_lea.vmem [#allocation10], %s482
          %484 = dma.done %s480, 128
        $region68: #{tpu_custom_call.1} parent=55 // pred_fallthru
          _
      $region56: #{tpu_custom_call.1} parent=5 // pred_fallthru
        _
    $region6: #{tpu_custom_call.1} parent=1 // loop_footer
      %s25 = sadd.s32 1, %s21
    $region7: #{tpu_custom_call.1} parent=1 // loop_footer_branch
      %20 = sbr.rel target = $region3
    $region8: #{tpu_custom_call.1} parent=1 // loop_exit
      _
    %485 = vsyncpa [#allocation3], 1
    %s486 = scalar_lea.sflag [#allocation3], 1
    %487 = vsyncpa %s486, 1
    %488 = vsyncpa [#allocation6], 1
    %489 = vsyncpa [#allocation4], 1
    %s490 = scalar_lea.sflag [#allocation4], 1
    %491 = vsyncpa %s490, 1
    %492 = vsyncpa [#allocation9], 1
    %s493 = scalar_lea.sflag [#allocation9], 1
    %494 = vsyncpa %s493, 1

</llo_original>
